<compile_context>
chip_gen: v6e
topology: v6e:2x2x1
jax: 0.10.0
libtpu: 0.0.40
codegen_flags: <defaults>
</compile_context>

<pallas_src>
import functools

import jax
import jax.numpy as jnp
from jax.experimental import pallas as pl
from jax.experimental.pallas import tpu as pltpu

NEG_INF = -1e9


def _pick_tile(nd, want):
    """Largest multiple-of-8 divisor of nd that is <= want, else the whole extent.

    Using a divisor (or the full extent) avoids materializing a padded HBM copy of the
    largest per-layer tensors (mask / edge scores) before the kernel runs."""
    if nd <= want or nd % 8 != 0:
        return nd                      # whole extent — block dim == full array dim is allowed
    t = min(want, nd)
    t -= t % 8
    while nd % t != 0:
        t -= 8
    return max(t, 8)


def _gat_ffn_kernel(*refs, num_heads, src_len, has_edge_score):
    """One WSWGAT layer, one destination-node tile vs. the full source set."""
    it = iter(refs)
    origin_ref = next(it)                                   # [Td, Dout]    f32 (dst tile)
    s_src_ref = next(it)                                    # [H, Ns]       f32 (hoisted logits)
    zstack_ref = next(it)                                   # [H*Ns, Dout]  f32 block-diag values
    escore_ref = next(it) if has_edge_score else None       # [Td, H*Ns]    bf16 (dst tile)
    mask_ref = next(it)                                     # [Td, Ns]      f32 adjacency
    gamma_ref = next(it)                                    # [1, Dout]
    beta_ref = next(it)                                     # [1, Dout]
    w1_ref = next(it)                                       # [Dout, Dffn]
    b1_ref = next(it)                                       # [1, Dffn]
    w2_ref = next(it)                                       # [Dffn, Dout]
    b2_ref = next(it)                                       # [1, Dout]
    out_ref = next(it)                                      # [Td, Dout]

    ns = src_len
    origin = origin_ref[...]

    # Hoisted mask work: one compare (+ one additive -inf bias for the edge-score path),
    # reused by every head.
    mask_pos = mask_ref[...] > 0.0
    if has_edge_score:
        neg_bias = jnp.where(mask_pos, 0.0, NEG_INF)

    # Per-head masked softmax.  The value aggregation is deferred to a single lane-dense
    # matmul against the block-diagonal Z_stack (no per-head 8-lane matmuls, no concat of
    # narrow outputs).
    alphas = []
    for h in range(num_heads):                               # static unroll over heads
        s_h = s_src_ref[h:h + 1, :]                          # [1, Ns] source-side logits
        if has_edge_score:
            logits = s_h + escore_ref[:, h * ns:(h + 1) * ns].astype(jnp.float32)  # [Td, Ns]
            e_h = jnp.where(logits > 0, logits, 0.01 * logits)   # leaky_relu (torch slope)
            e_h = e_h + neg_bias                                 # masked positions -> -inf
            e_h = e_h - jnp.max(e_h, axis=-1, keepdims=True)
            p = jnp.where(mask_pos, jnp.exp(e_h), 0.0)
        else:
            # Source-only logits: the exp numerator is identical for every destination row,
            # so compute it once per head ([1, Ns]) and broadcast through the row mask.
            e_row = jnp.where(s_h > 0, s_h, 0.01 * s_h)          # leaky_relu
            e_row = e_row - jnp.max(e_row, axis=-1, keepdims=True)
            p = jnp.where(mask_pos, jnp.exp(e_row), 0.0)         # broadcast -> [Td, Ns]
        denom = jnp.maximum(jnp.sum(p, axis=-1, keepdims=True), 1e-12)
        alphas.append(p * pl.reciprocal(denom, approx=True))     # divide -> EUP slot
    alpha_stack = jnp.concatenate(alphas, axis=-1)               # [Td, H*Ns]

    # One full-width MXU op for all heads (f32 in / f32 accumulate).
    agg = jnp.dot(alpha_stack, zstack_ref[...],
                  preferred_element_type=jnp.float32)            # [Td, Dout]

    # ELU (exp arg clamped so the discarded branch never overflows) + residual.
    h1 = jnp.where(agg > 0, agg, jnp.exp(jnp.minimum(agg, 0.0)) - 1.0) + origin

    # Positionwise FFN (pre-LayerNorm, residual); dropout omitted (eval).
    mu = jnp.mean(h1, axis=-1, keepdims=True)
    var = jnp.mean(jnp.square(h1 - mu), axis=-1, keepdims=True)
    xn = (h1 - mu) * jax.lax.rsqrt(var + 1e-6)
    xn = xn * gamma_ref[...] + beta_ref[...]
    inter = jnp.maximum(
        jnp.dot(xn, w1_ref[...], preferred_element_type=jnp.float32) + b1_ref[...], 0.0)
    ffn_out = jnp.dot(inter, w2_ref[...],
                      preferred_element_type=jnp.float32) + b2_ref[...]
    out_ref[...] = h1 + ffn_out


def gat_layer(x_src, origin, mask, escore, params, num_heads, tile_nd=128):
    """WSWGAT layer, tiled over destination nodes (grid axis marked "parallel").

    x_src  : [Ns, Din]   source node features
    origin : [Nd, Dout]  residual input for destination nodes
    mask   : [Nd, Ns]    dense adjacency (dst x src)
    escore : [Nd, H*Ns]  optional per-head edge-score bias, dst-major, heads on lanes
    """
    nd, dout = origin.shape
    ns, _ = x_src.shape
    dffn = params["w1"].shape[1]
    has_edge = escore is not None
    dh = dout // num_heads

    # --- Grid-invariant source projection hoisted out of the kernel (done once) ---
    z = jnp.dot(x_src, params["wp"], preferred_element_type=jnp.float32)          # [Ns, Dout]
    s_src_t = jnp.dot(z, params["a_src"], preferred_element_type=jnp.float32).T   # [H, Ns]

    # --- Block-diagonal stacked value matrix: one lane-dense aggregation matmul ---
    z_heads = z.reshape(ns, num_heads, dh)
    z_stack = jnp.zeros((num_heads * ns, dout), jnp.float32)
    for h in range(num_heads):                                   # static, tiny H
        z_stack = z_stack.at[h * ns:(h + 1) * ns, h * dh:(h + 1) * dh].set(z_heads[:, h, :])

    tile = _pick_tile(nd, tile_nd)
    grid = (nd // tile,)

    def full(shape):
        return pl.BlockSpec(shape, lambda *_: (0,) * len(shape))

    args = [origin, s_src_t, z_stack]
    specs = [pl.BlockSpec((tile, dout), lambda i: (i, 0)),
             full((num_heads, ns)),
             full((num_heads * ns, dout))]
    if has_edge:
        # bf16 storage halves the dominant DMA stream; it is only an additive pre-softmax
        # bias so bf16 is numerically safe (cast back to f32 element-wise in-kernel).
        args.append(escore.astype(jnp.bfloat16))
        specs.append(pl.BlockSpec((tile, num_heads * ns), lambda i: (i, 0)))
    args += [mask, params["gamma"], params["beta"],
             params["w1"], params["b1"], params["w2"], params["b2"]]
    specs += [pl.BlockSpec((tile, ns), lambda i: (i, 0)),
              full((1, dout)), full((1, dout)),
              full((dout, dffn)), full((1, dffn)),
              full((dffn, dout)), full((1, dout))]

    return pl.pallas_call(
        functools.partial(_gat_ffn_kernel, num_heads=num_heads,
                          src_len=ns, has_edge_score=has_edge),
        out_shape=jax.ShapeDtypeStruct((nd, dout), jnp.float32),
        grid=grid,
        in_specs=specs,
        out_specs=pl.BlockSpec((tile, dout), lambda i: (i, 0)),
        compiler_params=pltpu.CompilerParams(dimension_semantics=("parallel",)),
    )(*args)


def wgcn_forward(wid, tffrac, A_ww, A_ws, A_sn,
                 embed_table, tf_table,
                 p_w2w, p_w2s, p_s2n, a_edge, wh_w, wh_b,
                 hidden, feat_embed, n_head):
    S, W = A_ws.shape
    Nn = A_sn.shape[0]

    # --- set_wnfeature (glue: word-embedding gather) ---
    word_feature = jnp.take(embed_table, wid, axis=0)             # [W, word_emb]

    # --- word2word (W2W, 8 heads): no tf-idf edge term (edge path statically skipped) ---
    word_state = gat_layer(word_feature, word_feature, A_ww, None, p_w2w, 8)

    # --- word2sent (W2S, n_head heads) with tfidf edge attention term ---
    # Per-edge logits come from the tiny [10, H] table; laid out dst-major with heads
    # flattened onto lanes -> one contiguous (Td, H*W) DMA slab per grid step.
    edge_logits10 = jnp.dot(tf_table, a_edge)                     # [10, H]
    e_edge = edge_logits10[tffrac]                                # [S, W, H]
    escore_ws = jnp.transpose(e_edge, (0, 2, 1)).reshape(S, n_head * W)   # [S, H*W]
    sent_feature = jnp.zeros((S, hidden), jnp.float32)            # torch.zeros(len(snode_id), n_feature)
    sent_state = gat_layer(word_state, sent_feature, A_ws, escore_ws, p_w2s, n_head)

    # --- sent2news (S2N, 8 heads) ---
    news_state = jnp.zeros((Nn, feat_embed), jnp.float32)         # torch.zeros(len(Nnode_id), feat_embed)
    news_embedding = gat_layer(sent_state, news_state, A_sn, None, p_s2n, 8)

    # --- wh: Linear(feat_embed, 1) kept in the wrapper (lane-dense kernel output) ---
    return jnp.dot(news_embedding, wh_w) + wh_b                   # [Nn, 1]


if __name__ == "__main__":
    # Small, forward-consistent hyperparameters.
    vocab, word_emb, hidden, feat_embed, ffn_inner, n_head = 50, 64, 64, 32, 128, 8
    W, S, Nn = 16, 8, 2                                           # words / sentences / news nodes

    keys = iter(jax.random.split(jax.random.PRNGKey(0), 64))

    def nrm(shape, scale=0.1):
        return (scale * jax.random.normal(next(keys), shape)).astype(jnp.float32)

    embed_table = nrm((vocab, word_emb))                          # self._embed
    tf_table = nrm((10, feat_embed))                              # self._TFembed

    def make_gat_params(din, dout, heads):
        dh = dout // heads
        a_vec = nrm((heads, dh))
        a_src = jnp.zeros((dout, heads), jnp.float32)             # block-diagonal per-head attn vec
        for h in range(heads):
            a_src = a_src.at[h * dh:(h + 1) * dh, h].set(a_vec[h])
        return dict(
            wp=nrm((din, dout)),
            a_src=a_src,
            gamma=jnp.ones((1, dout), jnp.float32),
            beta=jnp.zeros((1, dout), jnp.float32),
            w1=nrm((dout, ffn_inner)),
            b1=jnp.zeros((1, ffn_inner), jnp.float32),
            w2=nrm((ffn_inner, dout)),
            b2=jnp.zeros((1, dout), jnp.float32),
        )

    p_w2w = make_gat_params(word_emb, word_emb, 8)                # word2word
    p_w2s = make_gat_params(word_emb, hidden, n_head)             # word2sent
    p_s2n = make_gat_params(hidden, feat_embed, 8)                # sent2news
    a_edge = nrm((feat_embed, n_head))                            # tfidf-embed -> per-head logit
    wh_w = nrm((feat_embed, 1))
    wh_b = jnp.zeros((1, 1), jnp.float32)

    # Synthetic graph in dense form.
    wid = jax.random.randint(next(keys), (W,), 0, vocab)          # word ids
    tffrac = jax.random.randint(next(keys), (S, W), 0, 10)        # edge tffrac in [0, 9]
    A_ww = (jax.random.uniform(next(keys), (W, W)) < 0.3).astype(jnp.float32)
    A_ww = jnp.maximum(A_ww, jnp.eye(W, dtype=jnp.float32))       # self loops
    A_ws = (jax.random.uniform(next(keys), (S, W)) < 0.4).astype(jnp.float32)
    A_ws = A_ws.at[:, 0].set(1.0)                                 # every sentence has >=1 word
    A_sn = jnp.ones((Nn, S), jnp.float32)                         # news connected to all sentences

    result = wgcn_forward(wid, tffrac, A_ww, A_ws, A_sn,
                          embed_table, tf_table,
                          p_w2w, p_w2s, p_s2n, a_edge, wh_w, wh_b,
                          hidden, feat_embed, n_head)
    result = jax.block_until_ready(result)
    assert result.shape == (Nn, 1) and result.dtype == jnp.float32
    assert bool(jnp.all(jnp.isfinite(result)))
    print("KERNEL_OK")
</pallas_src>

<mosaic_0001>
module attributes {stable_mosaic.version = 11 : i64} {
  func.func @_gat_ffn_kernel(%arg0: i32, %arg1: memref<16x64xf32, #tpu.memory_space<vmem>>, %arg2: memref<8x16xf32, #tpu.memory_space<vmem>>, %arg3: memref<128x64xf32, #tpu.memory_space<vmem>>, %arg4: memref<16x16xf32, #tpu.memory_space<vmem>>, %arg5: memref<1x64xf32, #tpu.memory_space<vmem>>, %arg6: memref<1x64xf32, #tpu.memory_space<vmem>>, %arg7: memref<64x128xf32, #tpu.memory_space<vmem>>, %arg8: memref<1x128xf32, #tpu.memory_space<vmem>>, %arg9: memref<128x64xf32, #tpu.memory_space<vmem>>, %arg10: memref<1x64xf32, #tpu.memory_space<vmem>>, %arg11: memref<16x64xf32, #tpu.memory_space<vmem>>) attributes {dimension_semantics = [#tpu.dimension_semantics<parallel>], iteration_bounds = array<i64: 1>, scalar_prefetch = 0 : i64, scratch_operands = 0 : i64, tpu.core_type = #tpu.core_type<tc>, window_params = [{transform_indices = @transform_0, window_bounds = array<i64: 16, 64>}, {pipeline_mode = #tpu.pipeline_mode<synchronous>, transform_indices = @transform_1, window_bounds = array<i64: 8, 16>}, {pipeline_mode = #tpu.pipeline_mode<synchronous>, transform_indices = @transform_2, window_bounds = array<i64: 128, 64>}, {transform_indices = @transform_3, window_bounds = array<i64: 16, 16>}, {pipeline_mode = #tpu.pipeline_mode<synchronous>, transform_indices = @transform_4, window_bounds = array<i64: 1, 64>}, {pipeline_mode = #tpu.pipeline_mode<synchronous>, transform_indices = @transform_5, window_bounds = array<i64: 1, 64>}, {pipeline_mode = #tpu.pipeline_mode<synchronous>, transform_indices = @transform_6, window_bounds = array<i64: 64, 128>}, {pipeline_mode = #tpu.pipeline_mode<synchronous>, transform_indices = @transform_7, window_bounds = array<i64: 1, 128>}, {pipeline_mode = #tpu.pipeline_mode<synchronous>, transform_indices = @transform_8, window_bounds = array<i64: 128, 64>}, {pipeline_mode = #tpu.pipeline_mode<synchronous>, transform_indices = @transform_9, window_bounds = array<i64: 1, 64>}, {transform_indices = @transform_10, window_bounds = array<i64: 16, 64>}]} {
    %c0 = arith.constant 0 : index
    %c0_0 = arith.constant 0 : index
    %0 = vector.load %arg1[%c0, %c0_0] : memref<16x64xf32, #tpu.memory_space<vmem>>, vector<16x64xf32>
    %c0_1 = arith.constant 0 : index
    %c0_2 = arith.constant 0 : index
    %1 = vector.load %arg4[%c0_1, %c0_2] : memref<16x16xf32, #tpu.memory_space<vmem>>, vector<16x16xf32>
    %cst = arith.constant 0.000000e+00 : f32
    %2 = vector.broadcast %cst : f32 to vector<16x16xf32>
    %3 = arith.cmpf ogt, %1, %2 : vector<16x16xf32>
    %c0_3 = arith.constant 0 : index
    %c0_4 = arith.constant 0 : index
    %4 = vector.load %arg2[%c0_3, %c0_4] : memref<8x16xf32, #tpu.memory_space<vmem>>, vector<1x16xf32>
    %cst_5 = arith.constant 0.000000e+00 : f32
    %5 = vector.broadcast %cst_5 : f32 to vector<1x16xf32>
    %6 = arith.cmpf ogt, %4, %5 : vector<1x16xf32>
    %cst_6 = arith.constant 0.00999999977 : f32
    %7 = vector.broadcast %cst_6 : f32 to vector<1x16xf32>
    %8 = arith.mulf %7, %4 : vector<1x16xf32>
    %9 = arith.select %6, %4, %8 : vector<1x16xi1>, vector<1x16xf32>
    %cst_7 = arith.constant dense<0xFF800000> : vector<1xf32>
    %10 = vector.multi_reduction <maximumf>, %9, %cst_7 [1] : vector<1x16xf32> to vector<1xf32>
    %11 = vector.shape_cast %10 : vector<1xf32> to vector<1x1xf32>
    %12 = vector.broadcast %11 : vector<1x1xf32> to vector<1x16xf32>
    %13 = arith.subf %9, %12 : vector<1x16xf32>
    %14 = math.exp %13 : vector<1x16xf32>
    %cst_8 = arith.constant 0.000000e+00 : f32
    %15 = vector.shape_cast %14 : vector<1x16xf32> to vector<1x16xf32>
    %16 = vector.broadcast %15 : vector<1x16xf32> to vector<16x16xf32>
    %17 = vector.broadcast %cst_8 : f32 to vector<16x16xf32>
    %18 = arith.select %3, %16, %17 : vector<16x16xi1>, vector<16x16xf32>
    %cst_9 = arith.constant dense<0.000000e+00> : vector<16xf32>
    %19 = vector.multi_reduction <add>, %18, %cst_9 [1] : vector<16x16xf32> to vector<16xf32>
    %20 = vector.shape_cast %19 : vector<16xf32> to vector<16x1xf32>
    %cst_10 = arith.constant 9.99999996E-13 : f32
    %21 = vector.broadcast %cst_10 : f32 to vector<16x1xf32>
    %22 = arith.maximumf %20, %21 : vector<16x1xf32>
    %23 = tpu.reciprocal %22 {approx = true} : vector<16x1xf32> -> vector<16x1xf32>
    %24 = vector.broadcast %23 : vector<16x1xf32> to vector<16x16xf32>
    %25 = arith.mulf %18, %24 : vector<16x16xf32>
    %c1 = arith.constant 1 : index
    %c0_11 = arith.constant 0 : index
    %26 = vector.load %arg2[%c1, %c0_11] : memref<8x16xf32, #tpu.memory_space<vmem>>, vector<1x16xf32>
    %cst_12 = arith.constant 0.000000e+00 : f32
    %27 = vector.broadcast %cst_12 : f32 to vector<1x16xf32>
    %28 = arith.cmpf ogt, %26, %27 : vector<1x16xf32>
    %cst_13 = arith.constant 0.00999999977 : f32
    %29 = vector.broadcast %cst_13 : f32 to vector<1x16xf32>
    %30 = arith.mulf %29, %26 : vector<1x16xf32>
    %31 = arith.select %28, %26, %30 : vector<1x16xi1>, vector<1x16xf32>
    %cst_14 = arith.constant dense<0xFF800000> : vector<1xf32>
    %32 = vector.multi_reduction <maximumf>, %31, %cst_14 [1] : vector<1x16xf32> to vector<1xf32>
    %33 = vector.shape_cast %32 : vector<1xf32> to vector<1x1xf32>
    %34 = vector.broadcast %33 : vector<1x1xf32> to vector<1x16xf32>
    %35 = arith.subf %31, %34 : vector<1x16xf32>
    %36 = math.exp %35 : vector<1x16xf32>
    %cst_15 = arith.constant 0.000000e+00 : f32
    %37 = vector.shape_cast %36 : vector<1x16xf32> to vector<1x16xf32>
    %38 = vector.broadcast %37 : vector<1x16xf32> to vector<16x16xf32>
    %39 = vector.broadcast %cst_15 : f32 to vector<16x16xf32>
    %40 = arith.select %3, %38, %39 : vector<16x16xi1>, vector<16x16xf32>
    %cst_16 = arith.constant dense<0.000000e+00> : vector<16xf32>
    %41 = vector.multi_reduction <add>, %40, %cst_16 [1] : vector<16x16xf32> to vector<16xf32>
    %42 = vector.shape_cast %41 : vector<16xf32> to vector<16x1xf32>
    %cst_17 = arith.constant 9.99999996E-13 : f32
    %43 = vector.broadcast %cst_17 : f32 to vector<16x1xf32>
    %44 = arith.maximumf %42, %43 : vector<16x1xf32>
    %45 = tpu.reciprocal %44 {approx = true} : vector<16x1xf32> -> vector<16x1xf32>
    %46 = vector.broadcast %45 : vector<16x1xf32> to vector<16x16xf32>
    %47 = arith.mulf %40, %46 : vector<16x16xf32>
    %c2 = arith.constant 2 : index
    %c0_18 = arith.constant 0 : index
    %48 = vector.load %arg2[%c2, %c0_18] : memref<8x16xf32, #tpu.memory_space<vmem>>, vector<1x16xf32>
    %cst_19 = arith.constant 0.000000e+00 : f32
    %49 = vector.broadcast %cst_19 : f32 to vector<1x16xf32>
    %50 = arith.cmpf ogt, %48, %49 : vector<1x16xf32>
    %cst_20 = arith.constant 0.00999999977 : f32
    %51 = vector.broadcast %cst_20 : f32 to vector<1x16xf32>
    %52 = arith.mulf %51, %48 : vector<1x16xf32>
    %53 = arith.select %50, %48, %52 : vector<1x16xi1>, vector<1x16xf32>
    %cst_21 = arith.constant dense<0xFF800000> : vector<1xf32>
    %54 = vector.multi_reduction <maximumf>, %53, %cst_21 [1] : vector<1x16xf32> to vector<1xf32>
    %55 = vector.shape_cast %54 : vector<1xf32> to vector<1x1xf32>
    %56 = vector.broadcast %55 : vector<1x1xf32> to vector<1x16xf32>
    %57 = arith.subf %53, %56 : vector<1x16xf32>
    %58 = math.exp %57 : vector<1x16xf32>
    %cst_22 = arith.constant 0.000000e+00 : f32
    %59 = vector.shape_cast %58 : vector<1x16xf32> to vector<1x16xf32>
    %60 = vector.broadcast %59 : vector<1x16xf32> to vector<16x16xf32>
    %61 = vector.broadcast %cst_22 : f32 to vector<16x16xf32>
    %62 = arith.select %3, %60, %61 : vector<16x16xi1>, vector<16x16xf32>
    %cst_23 = arith.constant dense<0.000000e+00> : vector<16xf32>
    %63 = vector.multi_reduction <add>, %62, %cst_23 [1] : vector<16x16xf32> to vector<16xf32>
    %64 = vector.shape_cast %63 : vector<16xf32> to vector<16x1xf32>
    %cst_24 = arith.constant 9.99999996E-13 : f32
    %65 = vector.broadcast %cst_24 : f32 to vector<16x1xf32>
    %66 = arith.maximumf %64, %65 : vector<16x1xf32>
    %67 = tpu.reciprocal %66 {approx = true} : vector<16x1xf32> -> vector<16x1xf32>
    %68 = vector.broadcast %67 : vector<16x1xf32> to vector<16x16xf32>
    %69 = arith.mulf %62, %68 : vector<16x16xf32>
    %c3 = arith.constant 3 : index
    %c0_25 = arith.constant 0 : index
    %70 = vector.load %arg2[%c3, %c0_25] : memref<8x16xf32, #tpu.memory_space<vmem>>, vector<1x16xf32>
    %cst_26 = arith.constant 0.000000e+00 : f32
    %71 = vector.broadcast %cst_26 : f32 to vector<1x16xf32>
    %72 = arith.cmpf ogt, %70, %71 : vector<1x16xf32>
    %cst_27 = arith.constant 0.00999999977 : f32
    %73 = vector.broadcast %cst_27 : f32 to vector<1x16xf32>
    %74 = arith.mulf %73, %70 : vector<1x16xf32>
    %75 = arith.select %72, %70, %74 : vector<1x16xi1>, vector<1x16xf32>
    %cst_28 = arith.constant dense<0xFF800000> : vector<1xf32>
    %76 = vector.multi_reduction <maximumf>, %75, %cst_28 [1] : vector<1x16xf32> to vector<1xf32>
    %77 = vector.shape_cast %76 : vector<1xf32> to vector<1x1xf32>
    %78 = vector.broadcast %77 : vector<1x1xf32> to vector<1x16xf32>
    %79 = arith.subf %75, %78 : vector<1x16xf32>
    %80 = math.exp %79 : vector<1x16xf32>
    %cst_29 = arith.constant 0.000000e+00 : f32
    %81 = vector.shape_cast %80 : vector<1x16xf32> to vector<1x16xf32>
    %82 = vector.broadcast %81 : vector<1x16xf32> to vector<16x16xf32>
    %83 = vector.broadcast %cst_29 : f32 to vector<16x16xf32>
    %84 = arith.select %3, %82, %83 : vector<16x16xi1>, vector<16x16xf32>
    %cst_30 = arith.constant dense<0.000000e+00> : vector<16xf32>
    %85 = vector.multi_reduction <add>, %84, %cst_30 [1] : vector<16x16xf32> to vector<16xf32>
    %86 = vector.shape_cast %85 : vector<16xf32> to vector<16x1xf32>
    %cst_31 = arith.constant 9.99999996E-13 : f32
    %87 = vector.broadcast %cst_31 : f32 to vector<16x1xf32>
    %88 = arith.maximumf %86, %87 : vector<16x1xf32>
    %89 = tpu.reciprocal %88 {approx = true} : vector<16x1xf32> -> vector<16x1xf32>
    %90 = vector.broadcast %89 : vector<16x1xf32> to vector<16x16xf32>
    %91 = arith.mulf %84, %90 : vector<16x16xf32>
    %c4 = arith.constant 4 : index
    %c0_32 = arith.constant 0 : index
    %92 = vector.load %arg2[%c4, %c0_32] : memref<8x16xf32, #tpu.memory_space<vmem>>, vector<1x16xf32>
    %cst_33 = arith.constant 0.000000e+00 : f32
    %93 = vector.broadcast %cst_33 : f32 to vector<1x16xf32>
    %94 = arith.cmpf ogt, %92, %93 : vector<1x16xf32>
    %cst_34 = arith.constant 0.00999999977 : f32
    %95 = vector.broadcast %cst_34 : f32 to vector<1x16xf32>
    %96 = arith.mulf %95, %92 : vector<1x16xf32>
    %97 = arith.select %94, %92, %96 : vector<1x16xi1>, vector<1x16xf32>
    %cst_35 = arith.constant dense<0xFF800000> : vector<1xf32>
    %98 = vector.multi_reduction <maximumf>, %97, %cst_35 [1] : vector<1x16xf32> to vector<1xf32>
    %99 = vector.shape_cast %98 : vector<1xf32> to vector<1x1xf32>
    %100 = vector.broadcast %99 : vector<1x1xf32> to vector<1x16xf32>
    %101 = arith.subf %97, %100 : vector<1x16xf32>
    %102 = math.exp %101 : vector<1x16xf32>
    %cst_36 = arith.constant 0.000000e+00 : f32
    %103 = vector.shape_cast %102 : vector<1x16xf32> to vector<1x16xf32>
    %104 = vector.broadcast %103 : vector<1x16xf32> to vector<16x16xf32>
    %105 = vector.broadcast %cst_36 : f32 to vector<16x16xf32>
    %106 = arith.select %3, %104, %105 : vector<16x16xi1>, vector<16x16xf32>
    %cst_37 = arith.constant dense<0.000000e+00> : vector<16xf32>
    %107 = vector.multi_reduction <add>, %106, %cst_37 [1] : vector<16x16xf32> to vector<16xf32>
    %108 = vector.shape_cast %107 : vector<16xf32> to vector<16x1xf32>
    %cst_38 = arith.constant 9.99999996E-13 : f32
    %109 = vector.broadcast %cst_38 : f32 to vector<16x1xf32>
    %110 = arith.maximumf %108, %109 : vector<16x1xf32>
    %111 = tpu.reciprocal %110 {approx = true} : vector<16x1xf32> -> vector<16x1xf32>
    %112 = vector.broadcast %111 : vector<16x1xf32> to vector<16x16xf32>
    %113 = arith.mulf %106, %112 : vector<16x16xf32>
    %c5 = arith.constant 5 : index
    %c0_39 = arith.constant 0 : index
    %114 = vector.load %arg2[%c5, %c0_39] : memref<8x16xf32, #tpu.memory_space<vmem>>, vector<1x16xf32>
    %cst_40 = arith.constant 0.000000e+00 : f32
    %115 = vector.broadcast %cst_40 : f32 to vector<1x16xf32>
    %116 = arith.cmpf ogt, %114, %115 : vector<1x16xf32>
    %cst_41 = arith.constant 0.00999999977 : f32
    %117 = vector.broadcast %cst_41 : f32 to vector<1x16xf32>
    %118 = arith.mulf %117, %114 : vector<1x16xf32>
    %119 = arith.select %116, %114, %118 : vector<1x16xi1>, vector<1x16xf32>
    %cst_42 = arith.constant dense<0xFF800000> : vector<1xf32>
    %120 = vector.multi_reduction <maximumf>, %119, %cst_42 [1] : vector<1x16xf32> to vector<1xf32>
    %121 = vector.shape_cast %120 : vector<1xf32> to vector<1x1xf32>
    %122 = vector.broadcast %121 : vector<1x1xf32> to vector<1x16xf32>
    %123 = arith.subf %119, %122 : vector<1x16xf32>
    %124 = math.exp %123 : vector<1x16xf32>
    %cst_43 = arith.constant 0.000000e+00 : f32
    %125 = vector.shape_cast %124 : vector<1x16xf32> to vector<1x16xf32>
    %126 = vector.broadcast %125 : vector<1x16xf32> to vector<16x16xf32>
    %127 = vector.broadcast %cst_43 : f32 to vector<16x16xf32>
    %128 = arith.select %3, %126, %127 : vector<16x16xi1>, vector<16x16xf32>
    %cst_44 = arith.constant dense<0.000000e+00> : vector<16xf32>
    %129 = vector.multi_reduction <add>, %128, %cst_44 [1] : vector<16x16xf32> to vector<16xf32>
    %130 = vector.shape_cast %129 : vector<16xf32> to vector<16x1xf32>
    %cst_45 = arith.constant 9.99999996E-13 : f32
    %131 = vector.broadcast %cst_45 : f32 to vector<16x1xf32>
    %132 = arith.maximumf %130, %131 : vector<16x1xf32>
    %133 = tpu.reciprocal %132 {approx = true} : vector<16x1xf32> -> vector<16x1xf32>
    %134 = vector.broadcast %133 : vector<16x1xf32> to vector<16x16xf32>
    %135 = arith.mulf %128, %134 : vector<16x16xf32>
    %c6 = arith.constant 6 : index
    %c0_46 = arith.constant 0 : index
    %136 = vector.load %arg2[%c6, %c0_46] : memref<8x16xf32, #tpu.memory_space<vmem>>, vector<1x16xf32>
    %cst_47 = arith.constant 0.000000e+00 : f32
    %137 = vector.broadcast %cst_47 : f32 to vector<1x16xf32>
    %138 = arith.cmpf ogt, %136, %137 : vector<1x16xf32>
    %cst_48 = arith.constant 0.00999999977 : f32
    %139 = vector.broadcast %cst_48 : f32 to vector<1x16xf32>
    %140 = arith.mulf %139, %136 : vector<1x16xf32>
    %141 = arith.select %138, %136, %140 : vector<1x16xi1>, vector<1x16xf32>
    %cst_49 = arith.constant dense<0xFF800000> : vector<1xf32>
    %142 = vector.multi_reduction <maximumf>, %141, %cst_49 [1] : vector<1x16xf32> to vector<1xf32>
    %143 = vector.shape_cast %142 : vector<1xf32> to vector<1x1xf32>
    %144 = vector.broadcast %143 : vector<1x1xf32> to vector<1x16xf32>
    %145 = arith.subf %141, %144 : vector<1x16xf32>
    %146 = math.exp %145 : vector<1x16xf32>
    %cst_50 = arith.constant 0.000000e+00 : f32
    %147 = vector.shape_cast %146 : vector<1x16xf32> to vector<1x16xf32>
    %148 = vector.broadcast %147 : vector<1x16xf32> to vector<16x16xf32>
    %149 = vector.broadcast %cst_50 : f32 to vector<16x16xf32>
    %150 = arith.select %3, %148, %149 : vector<16x16xi1>, vector<16x16xf32>
    %cst_51 = arith.constant dense<0.000000e+00> : vector<16xf32>
    %151 = vector.multi_reduction <add>, %150, %cst_51 [1] : vector<16x16xf32> to vector<16xf32>
    %152 = vector.shape_cast %151 : vector<16xf32> to vector<16x1xf32>
    %cst_52 = arith.constant 9.99999996E-13 : f32
    %153 = vector.broadcast %cst_52 : f32 to vector<16x1xf32>
    %154 = arith.maximumf %152, %153 : vector<16x1xf32>
    %155 = tpu.reciprocal %154 {approx = true} : vector<16x1xf32> -> vector<16x1xf32>
    %156 = vector.broadcast %155 : vector<16x1xf32> to vector<16x16xf32>
    %157 = arith.mulf %150, %156 : vector<16x16xf32>
    %c7 = arith.constant 7 : index
    %c0_53 = arith.constant 0 : index
    %158 = vector.load %arg2[%c7, %c0_53] : memref<8x16xf32, #tpu.memory_space<vmem>>, vector<1x16xf32>
    %cst_54 = arith.constant 0.000000e+00 : f32
    %159 = vector.broadcast %cst_54 : f32 to vector<1x16xf32>
    %160 = arith.cmpf ogt, %158, %159 : vector<1x16xf32>
    %cst_55 = arith.constant 0.00999999977 : f32
    %161 = vector.broadcast %cst_55 : f32 to vector<1x16xf32>
    %162 = arith.mulf %161, %158 : vector<1x16xf32>
    %163 = arith.select %160, %158, %162 : vector<1x16xi1>, vector<1x16xf32>
    %cst_56 = arith.constant dense<0xFF800000> : vector<1xf32>
    %164 = vector.multi_reduction <maximumf>, %163, %cst_56 [1] : vector<1x16xf32> to vector<1xf32>
    %165 = vector.shape_cast %164 : vector<1xf32> to vector<1x1xf32>
    %166 = vector.broadcast %165 : vector<1x1xf32> to vector<1x16xf32>
    %167 = arith.subf %163, %166 : vector<1x16xf32>
    %168 = math.exp %167 : vector<1x16xf32>
    %cst_57 = arith.constant 0.000000e+00 : f32
    %169 = vector.shape_cast %168 : vector<1x16xf32> to vector<1x16xf32>
    %170 = vector.broadcast %169 : vector<1x16xf32> to vector<16x16xf32>
    %171 = vector.broadcast %cst_57 : f32 to vector<16x16xf32>
    %172 = arith.select %3, %170, %171 : vector<16x16xi1>, vector<16x16xf32>
    %cst_58 = arith.constant dense<0.000000e+00> : vector<16xf32>
    %173 = vector.multi_reduction <add>, %172, %cst_58 [1] : vector<16x16xf32> to vector<16xf32>
    %174 = vector.shape_cast %173 : vector<16xf32> to vector<16x1xf32>
    %cst_59 = arith.constant 9.99999996E-13 : f32
    %175 = vector.broadcast %cst_59 : f32 to vector<16x1xf32>
    %176 = arith.maximumf %174, %175 : vector<16x1xf32>
    %177 = tpu.reciprocal %176 {approx = true} : vector<16x1xf32> -> vector<16x1xf32>
    %178 = vector.broadcast %177 : vector<16x1xf32> to vector<16x16xf32>
    %179 = arith.mulf %172, %178 : vector<16x16xf32>
    %180 = tpu.concatenate %25, %47, %69, %91, %113, %135, %157, %179 in 1 : vector<16x16xf32>, vector<16x16xf32>, vector<16x16xf32>, vector<16x16xf32>, vector<16x16xf32>, vector<16x16xf32>, vector<16x16xf32>, vector<16x16xf32> -> vector<16x128xf32>
    %c0_60 = arith.constant 0 : index
    %c0_61 = arith.constant 0 : index
    %181 = vector.load %arg3[%c0_60, %c0_61] : memref<128x64xf32, #tpu.memory_space<vmem>>, vector<128x64xf32>
    %cst_62 = arith.constant dense<0.000000e+00> : vector<16x64xf32>
    %182 = tpu.matmul %180, %181, %cst_62 {dimension_numbers = #tpu.dot_dimension_numbers<[1], [0], [0], [1], [0, 0, 1, 1], [], []>} : vector<16x128xf32>, vector<128x64xf32>, vector<16x64xf32> -> vector<16x64xf32>
    %cst_63 = arith.constant 0.000000e+00 : f32
    %183 = vector.broadcast %cst_63 : f32 to vector<16x64xf32>
    %184 = arith.cmpf ogt, %182, %183 : vector<16x64xf32>
    %cst_64 = arith.constant 0.000000e+00 : f32
    %185 = vector.broadcast %cst_64 : f32 to vector<16x64xf32>
    %186 = arith.minimumf %182, %185 : vector<16x64xf32>
    %187 = math.exp %186 : vector<16x64xf32>
    %cst_65 = arith.constant 1.000000e+00 : f32
    %188 = vector.broadcast %cst_65 : f32 to vector<16x64xf32>
    %189 = arith.subf %187, %188 : vector<16x64xf32>
    %190 = arith.select %184, %182, %189 : vector<16x64xi1>, vector<16x64xf32>
    %191 = arith.addf %190, %0 : vector<16x64xf32>
    %cst_66 = arith.constant dense<0.000000e+00> : vector<16xf32>
    %192 = vector.multi_reduction <add>, %191, %cst_66 [1] : vector<16x64xf32> to vector<16xf32>
    %193 = vector.shape_cast %192 : vector<16xf32> to vector<16x1xf32>
    %cst_67 = arith.constant 6.400000e+01 : f32
    %194 = vector.broadcast %cst_67 : f32 to vector<16x1xf32>
    %195 = arith.divf %193, %194 : vector<16x1xf32>
    %196 = vector.broadcast %195 : vector<16x1xf32> to vector<16x64xf32>
    %197 = arith.subf %191, %196 : vector<16x64xf32>
    %198 = arith.mulf %197, %197 : vector<16x64xf32>
    %cst_68 = arith.constant dense<0.000000e+00> : vector<16xf32>
    %199 = vector.multi_reduction <add>, %198, %cst_68 [1] : vector<16x64xf32> to vector<16xf32>
    %200 = vector.shape_cast %199 : vector<16xf32> to vector<16x1xf32>
    %cst_69 = arith.constant 6.400000e+01 : f32
    %201 = vector.broadcast %cst_69 : f32 to vector<16x1xf32>
    %202 = arith.divf %200, %201 : vector<16x1xf32>
    %203 = vector.broadcast %195 : vector<16x1xf32> to vector<16x64xf32>
    %204 = arith.subf %191, %203 : vector<16x64xf32>
    %cst_70 = arith.constant 9.99999997E-7 : f32
    %205 = vector.broadcast %cst_70 : f32 to vector<16x1xf32>
    %206 = arith.addf %202, %205 : vector<16x1xf32>
    %207 = math.rsqrt %206 : vector<16x1xf32>
    %208 = vector.broadcast %207 : vector<16x1xf32> to vector<16x64xf32>
    %209 = arith.mulf %204, %208 : vector<16x64xf32>
    %c0_71 = arith.constant 0 : index
    %c0_72 = arith.constant 0 : index
    %210 = vector.load %arg5[%c0_71, %c0_72] : memref<1x64xf32, #tpu.memory_space<vmem>>, vector<1x64xf32>
    %211 = vector.broadcast %210 : vector<1x64xf32> to vector<16x64xf32>
    %212 = arith.mulf %209, %211 : vector<16x64xf32>
    %c0_73 = arith.constant 0 : index
    %c0_74 = arith.constant 0 : index
    %213 = vector.load %arg6[%c0_73, %c0_74] : memref<1x64xf32, #tpu.memory_space<vmem>>, vector<1x64xf32>
    %214 = vector.broadcast %213 : vector<1x64xf32> to vector<16x64xf32>
    %215 = arith.addf %212, %214 : vector<16x64xf32>
    %c0_75 = arith.constant 0 : index
    %c0_76 = arith.constant 0 : index
    %216 = vector.load %arg7[%c0_75, %c0_76] : memref<64x128xf32, #tpu.memory_space<vmem>>, vector<64x128xf32>
    %cst_77 = arith.constant dense<0.000000e+00> : vector<16x128xf32>
    %217 = tpu.matmul %215, %216, %cst_77 {dimension_numbers = #tpu.dot_dimension_numbers<[1], [0], [0], [1], [0, 0, 1, 1], [], []>} : vector<16x64xf32>, vector<64x128xf32>, vector<16x128xf32> -> vector<16x128xf32>
    %c0_78 = arith.constant 0 : index
    %c0_79 = arith.constant 0 : index
    %218 = vector.load %arg8[%c0_78, %c0_79] : memref<1x128xf32, #tpu.memory_space<vmem>>, vector<1x128xf32>
    %219 = vector.broadcast %218 : vector<1x128xf32> to vector<16x128xf32>
    %220 = arith.addf %217, %219 : vector<16x128xf32>
    %cst_80 = arith.constant 0.000000e+00 : f32
    %221 = vector.broadcast %cst_80 : f32 to vector<16x128xf32>
    %222 = arith.maximumf %220, %221 : vector<16x128xf32>
    %c0_81 = arith.constant 0 : index
    %c0_82 = arith.constant 0 : index
    %223 = vector.load %arg9[%c0_81, %c0_82] : memref<128x64xf32, #tpu.memory_space<vmem>>, vector<128x64xf32>
    %cst_83 = arith.constant dense<0.000000e+00> : vector<16x64xf32>
    %224 = tpu.matmul %222, %223, %cst_83 {dimension_numbers = #tpu.dot_dimension_numbers<[1], [0], [0], [1], [0, 0, 1, 1], [], []>} : vector<16x128xf32>, vector<128x64xf32>, vector<16x64xf32> -> vector<16x64xf32>
    %c0_84 = arith.constant 0 : index
    %c0_85 = arith.constant 0 : index
    %225 = vector.load %arg10[%c0_84, %c0_85] : memref<1x64xf32, #tpu.memory_space<vmem>>, vector<1x64xf32>
    %226 = vector.broadcast %225 : vector<1x64xf32> to vector<16x64xf32>
    %227 = arith.addf %224, %226 : vector<16x64xf32>
    %228 = arith.addf %191, %227 : vector<16x64xf32>
    %c0_86 = arith.constant 0 : index
    %c0_87 = arith.constant 0 : index
    %229 = vector.load %arg11[%c0_86, %c0_87] : memref<16x64xf32, #tpu.memory_space<vmem>>, vector<16x64xf32>
    tpu.vector_store %arg11[%c0_86, %c0_87], %228 {strides = array<i32>} : memref<16x64xf32, #tpu.memory_space<vmem>>, vector<16x64xf32>,
    return
  }
  func.func @transform_0(%arg0: i32) -> (i32, i32) {
    %c0_i32 = arith.constant 0 : i32
    %c0_i32_0 = arith.constant 0 : i32
    return %arg0, %c0_i32 : i32, i32
  }
  func.func @transform_1(%arg0: i32) -> (i32, i32) {
    %c0_i32 = arith.constant 0 : i32
    %c0_i32_0 = arith.constant 0 : i32
    %c0_i32_1 = arith.constant 0 : i32
    return %c0_i32, %c0_i32_0 : i32, i32
  }
  func.func @transform_2(%arg0: i32) -> (i32, i32) {
    %c0_i32 = arith.constant 0 : i32
    %c0_i32_0 = arith.constant 0 : i32
    %c0_i32_1 = arith.constant 0 : i32
    return %c0_i32, %c0_i32_0 : i32, i32
  }
  func.func @transform_3(%arg0: i32) -> (i32, i32) {
    %c0_i32 = arith.constant 0 : i32
    %c0_i32_0 = arith.constant 0 : i32
    return %arg0, %c0_i32 : i32, i32
  }
  func.func @transform_4(%arg0: i32) -> (i32, i32) {
    %c0_i32 = arith.constant 0 : i32
    %c0_i32_0 = arith.constant 0 : i32
    %c0_i32_1 = arith.constant 0 : i32
    return %c0_i32, %c0_i32_0 : i32, i32
  }
  func.func @transform_5(%arg0: i32) -> (i32, i32) {
    %c0_i32 = arith.constant 0 : i32
    %c0_i32_0 = arith.constant 0 : i32
    %c0_i32_1 = arith.constant 0 : i32
    return %c0_i32, %c0_i32_0 : i32, i32
  }
  func.func @transform_6(%arg0: i32) -> (i32, i32) {
    %c0_i32 = arith.constant 0 : i32
    %c0_i32_0 = arith.constant 0 : i32
    %c0_i32_1 = arith.constant 0 : i32
    return %c0_i32, %c0_i32_0 : i32, i32
  }
  func.func @transform_7(%arg0: i32) -> (i32, i32) {
    %c0_i32 = arith.constant 0 : i32
    %c0_i32_0 = arith.constant 0 : i32
    %c0_i32_1 = arith.constant 0 : i32
    return %c0_i32, %c0_i32_0 : i32, i32
  }
  func.func @transform_8(%arg0: i32) -> (i32, i32) {
    %c0_i32 = arith.constant 0 : i32
    %c0_i32_0 = arith.constant 0 : i32
    %c0_i32_1 = arith.constant 0 : i32
    return %c0_i32, %c0_i32_0 : i32, i32
  }
  func.func @transform_9(%arg0: i32) -> (i32, i32) {
    %c0_i32 = arith.constant 0 : i32
    %c0_i32_0 = arith.constant 0 : i32
    %c0_i32_1 = arith.constant 0 : i32
    return %c0_i32, %c0_i32_0 : i32, i32
  }
  func.func @transform_10(%arg0: i32) -> (i32, i32) {
    %c0_i32 = arith.constant 0 : i32
    %c0_i32_0 = arith.constant 0 : i32
    return %arg0, %c0_i32 : i32, i32
  }
}

</mosaic_0001>

<llo_original>
// kernel: tpu_custom_call.1
$region0: #{tpu_custom_call.1}
  #allocation0 [shape = 'u32[]', space=smem, size = 0x4, offset = 0x4, fixed_abs, tag = 'smem constant byte address 0x4 - core index']
  #allocation1 [shape = 'u32[144,128]{1,0:T(1,128)}', space=vmem, size = 0x12000, scoped, tag = 'internal scratch']
  %s0 = inlined_call_operand.vmem [shape: f32[16,64], index: 0, kind: input, shape index: {}]
  %s1 = inlined_call_operand.vmem [shape: f32[8,16], index: 1, kind: input, shape index: {}]
  %s2 = inlined_call_operand.vmem [shape: f32[128,64], index: 2, kind: input, shape index: {}]
  %s3 = inlined_call_operand.vmem [shape: f32[16,16], index: 3, kind: input, shape index: {}]
  %s4 = inlined_call_operand.vmem [shape: f32[1,64], index: 4, kind: input, shape index: {}]
  %s5 = inlined_call_operand.vmem [shape: f32[1,64], index: 5, kind: input, shape index: {}]
  %s6 = inlined_call_operand.vmem [shape: f32[64,128], index: 6, kind: input, shape index: {}]
  %s7 = inlined_call_operand.vmem [shape: f32[1,128], index: 7, kind: input, shape index: {}]
  %s8 = inlined_call_operand.vmem [shape: f32[128,64], index: 8, kind: input, shape index: {}]
  %s9 = inlined_call_operand.vmem [shape: f32[1,64], index: 9, kind: input, shape index: {}]
  %s10 = inlined_call_operand.hbm [shape: f32[16,64], index: 10, kind: output, shape index: {}]
  %s11 = sld [smem:[#allocation0]]
  $region50: #{tpu_custom_call.1} parent=0
    _
  %s13 = ssub.s32 1, %s11
  %s14 = scalar_select 0, %s13, %s11
  $region1: #{tpu_custom_call.1} parent=0
    #allocation2 [shape = 'u8[8192]{0}', space=vmem, size = 0x2000, scoped, tag = 'output window, operand 0, single buffered']
    #allocation3 [shape = 's32[1]{0}', space=sflag, size = 0x4, scoped, tag = 'scoped memory for tpu_custom_call.1']
    %15 = vsyncpa [#allocation3], 0
    // Predicated region
    $region2: #{tpu_custom_call.1} parent=1 // pred_check
      _
    $region3: #{tpu_custom_call.1} parent=1 // pred_check_branch
      %17 = sbr.rel (0) target = $region5
    $region4: #{tpu_custom_call.1} parent=1 // pred_region
      _
    $region5: #{tpu_custom_call.1} parent=1 // pred_fallthru
      _
    // Predicated region
    $region6: #{tpu_custom_call.1} parent=1 // pred_check
      _
    $region7: #{tpu_custom_call.1} parent=1 // pred_check_branch
      %19 = sbr.rel (0) target = $region9
    $region8: #{tpu_custom_call.1} parent=1 // pred_region
      _
    $region9: #{tpu_custom_call.1} parent=1 // pred_fallthru
      _
    // Predicated region
    $region10: #{tpu_custom_call.1} parent=1 // pred_check
      _
    $region11: #{tpu_custom_call.1} parent=1 // pred_check_branch
      %21 = sbr.rel (0) target = $region13
    $region12: #{tpu_custom_call.1} parent=1 // pred_region
      _
    $region13: #{tpu_custom_call.1} parent=1 // pred_fallthru
      _
    // Predicated region
    $region14: #{tpu_custom_call.1} parent=1 // pred_check
      _
    $region15: #{tpu_custom_call.1} parent=1 // pred_check_branch
      %23 = sbr.rel (0) target = $region17
    $region16: #{tpu_custom_call.1} parent=1 // pred_region
      _
    $region17: #{tpu_custom_call.1} parent=1 // pred_fallthru
      _
    // Predicated region
    $region18: #{tpu_custom_call.1} parent=1 // pred_check
      _
    $region19: #{tpu_custom_call.1} parent=1 // pred_check_branch
      %25 = sbr.rel (0) target = $region21
    $region20: #{tpu_custom_call.1} parent=1 // pred_region
      _
    $region21: #{tpu_custom_call.1} parent=1 // pred_fallthru
      _
    // Predicated region
    $region22: #{tpu_custom_call.1} parent=1 // pred_check
      _
    $region23: #{tpu_custom_call.1} parent=1 // pred_check_branch
      %27 = sbr.rel (0) target = $region25
    $region24: #{tpu_custom_call.1} parent=1 // pred_region
      _
    $region25: #{tpu_custom_call.1} parent=1 // pred_fallthru
      _
    // Predicated region
    $region26: #{tpu_custom_call.1} parent=1 // pred_check
      _
    $region27: #{tpu_custom_call.1} parent=1 // pred_check_branch
      %29 = sbr.rel (0) target = $region29
    $region28: #{tpu_custom_call.1} parent=1 // pred_region
      _
    $region29: #{tpu_custom_call.1} parent=1 // pred_fallthru
      _
    // Predicated region
    $region30: #{tpu_custom_call.1} parent=1 // pred_check
      _
    $region31: #{tpu_custom_call.1} parent=1 // pred_check_branch
      %31 = sbr.rel (0) target = $region33
    $region32: #{tpu_custom_call.1} parent=1 // pred_region
      _
    $region33: #{tpu_custom_call.1} parent=1 // pred_fallthru
      _
    // Predicated region
    $region34: #{tpu_custom_call.1} parent=1 // pred_check
      _
    $region35: #{tpu_custom_call.1} parent=1 // pred_check_branch
      %33 = sbr.rel (0) target = $region37
    $region36: #{tpu_custom_call.1} parent=1 // pred_region
      _
    $region37: #{tpu_custom_call.1} parent=1 // pred_fallthru
      _
    // Predicated region
    $region38: #{tpu_custom_call.1} parent=1 // pred_check
      _
    $region39: #{tpu_custom_call.1} parent=1 // pred_check_branch
      %35 = sbr.rel (0) target = $region41
    $region40: #{tpu_custom_call.1} parent=1 // pred_region
      _
    $region41: #{tpu_custom_call.1} parent=1 // pred_fallthru
      _
    %v36 = vld [vmem:[%s0] sm:$0xff]
    %v37 = vld [vmem:[%s0 + $0x8] sm:$0xff]
    %v38 = vld [vmem:[%s3] sm:$0xff]
    %v39 = vld [vmem:[%s3 + $0x8] sm:$0xff]
    %vm40 = vcmp.gt.f32.partialorder %v38, 0.0
    %vm41 = vcmp.gt.f32.partialorder %v39, 0.0
    %v42 = vld [vmem:[%s1] sm:$0x1]
    %vm43 = vcmp.gt.f32.partialorder %v42, 0.0
    %v44 = vmul.f32 %v42, 0.01
    %v45 = vsel %vm43, %v42, %v44
    %vm46 = vcmask 122880
    %v47 = vsel %vm46, %v45, -inf
    %48 = vmax.xlane.f32.xlu0 %v47
    %v49 = vpop.xlane.xlu0 %48
    %v50 = vsub.f32 %v45, %v49
    %v51 = vmul.f32 %v50, 1.442695
    %v52 = vpow.pop %v51
    %v53 = vlaneseq
    %v54 = vshrl.u32 %v53, 7
    %v55 = vsub.s32 0, %v54
    %v56 = vrot.slane %v52, %v55
    %v57 = vsel %vm40, %v56, 0.0
    %v58 = vsel %vm41, %v56, 0.0
    %vm59 = vcmask 130048
    %v60 = vsel %vm59, %v57, 0.0
    %61 = vadd.xlane.f32.xlu0 %v60
    %v62 = vpop.xlane.xlu0 %61
    %v63 = vsel %vm59, %v58, 0.0
    %64 = vadd.xlane.f32.xlu0 %v63
    %v65 = vpop.xlane.xlu0 %64
    %v66 = vmax.f32 %v62, 1e-12
    %v67 = vmax.f32 %v65, 1e-12
    %v68 = vrcp.pop %v66
    %v69 = vrcp.pop %v67
    %v70 = vmul.f32 %v57, %v68
    %v71 = vmul.f32 %v58, %v69
    %v72 = vld [vmem:[%s1 + $0x1] sm:$0x1]
    %vm73 = vcmp.gt.f32.partialorder %v72, 0.0
    %v74 = vmul.f32 %v72, 0.01
    %v75 = vsel %vm73, %v72, %v74
    %v76 = vsel %vm46, %v75, -inf
    %77 = vmax.xlane.f32.xlu0 %v76
    %v78 = vpop.xlane.xlu0 %77
    %v79 = vsub.f32 %v75, %v78
    %v80 = vmul.f32 %v79, 1.442695
    %v81 = vpow.pop %v80
    %v82 = vlaneseq
    %v83 = vshrl.u32 %v82, 7
    %v84 = vsub.s32 0, %v83
    %v85 = vrot.slane %v81, %v84
    %v86 = vsel %vm40, %v85, 0.0
    %v87 = vsel %vm41, %v85, 0.0
    %v88 = vsel %vm59, %v86, 0.0
    %89 = vadd.xlane.f32.xlu0 %v88
    %v90 = vpop.xlane.xlu0 %89
    %v91 = vsel %vm59, %v87, 0.0
    %92 = vadd.xlane.f32.xlu0 %v91
    %v93 = vpop.xlane.xlu0 %92
    %v94 = vmax.f32 %v90, 1e-12
    %v95 = vmax.f32 %v93, 1e-12
    %v96 = vrcp.pop %v94
    %v97 = vrcp.pop %v95
    %v98 = vmul.f32 %v86, %v96
    %v99 = vmul.f32 %v87, %v97
    %v100 = vld [vmem:[%s1 + $0x2] sm:$0x1]
    %vm101 = vcmp.gt.f32.partialorder %v100, 0.0
    %v102 = vmul.f32 %v100, 0.01
    %v103 = vsel %vm101, %v100, %v102
    %v104 = vsel %vm46, %v103, -inf
    %105 = vmax.xlane.f32.xlu0 %v104
    %v106 = vpop.xlane.xlu0 %105
    %v107 = vsub.f32 %v103, %v106
    %v108 = vmul.f32 %v107, 1.442695
    %v109 = vpow.pop %v108
    %v110 = vlaneseq
    %v111 = vshrl.u32 %v110, 7
    %v112 = vsub.s32 0, %v111
    %v113 = vrot.slane %v109, %v112
    %v114 = vsel %vm40, %v113, 0.0
    %v115 = vsel %vm41, %v113, 0.0
    %v116 = vsel %vm59, %v114, 0.0
    %117 = vadd.xlane.f32.xlu0 %v116
    %v118 = vpop.xlane.xlu0 %117
    %v119 = vsel %vm59, %v115, 0.0
    %120 = vadd.xlane.f32.xlu0 %v119
    %v121 = vpop.xlane.xlu0 %120
    %v122 = vmax.f32 %v118, 1e-12
    %v123 = vmax.f32 %v121, 1e-12
    %v124 = vrcp.pop %v122
    %v125 = vrcp.pop %v123
    %v126 = vmul.f32 %v114, %v124
    %v127 = vmul.f32 %v115, %v125
    %v128 = vld [vmem:[%s1 + $0x3] sm:$0x1]
    %vm129 = vcmp.gt.f32.partialorder %v128, 0.0
    %v130 = vmul.f32 %v128, 0.01
    %v131 = vsel %vm129, %v128, %v130
    %v132 = vsel %vm46, %v131, -inf
    %133 = vmax.xlane.f32.xlu0 %v132
    %v134 = vpop.xlane.xlu0 %133
    %v135 = vsub.f32 %v131, %v134
    %v136 = vmul.f32 %v135, 1.442695
    %v137 = vpow.pop %v136
    %v138 = vlaneseq
    %v139 = vshrl.u32 %v138, 7
    %v140 = vsub.s32 0, %v139
    %v141 = vrot.slane %v137, %v140
    %v142 = vsel %vm40, %v141, 0.0
    %v143 = vsel %vm41, %v141, 0.0
    %v144 = vsel %vm59, %v142, 0.0
    %145 = vadd.xlane.f32.xlu0 %v144
    %v146 = vpop.xlane.xlu0 %145
    %v147 = vsel %vm59, %v143, 0.0
    %148 = vadd.xlane.f32.xlu0 %v147
    %v149 = vpop.xlane.xlu0 %148
    %v150 = vmax.f32 %v146, 1e-12
    %v151 = vmax.f32 %v149, 1e-12
    %v152 = vrcp.pop %v150
    %v153 = vrcp.pop %v151
    %v154 = vmul.f32 %v142, %v152
    %v155 = vmul.f32 %v143, %v153
    %v156 = vld [vmem:[%s1 + $0x4] sm:$0x1]
    %vm157 = vcmp.gt.f32.partialorder %v156, 0.0
    %v158 = vmul.f32 %v156, 0.01
    %v159 = vsel %vm157, %v156, %v158
    %v160 = vsel %vm46, %v159, -inf
    %161 = vmax.xlane.f32.xlu0 %v160
    %v162 = vpop.xlane.xlu0 %161
    %v163 = vsub.f32 %v159, %v162
    %v164 = vmul.f32 %v163, 1.442695
    %v165 = vpow.pop %v164
    %v166 = vlaneseq
    %v167 = vshrl.u32 %v166, 7
    %v168 = vsub.s32 0, %v167
    %v169 = vrot.slane %v165, %v168
    %v170 = vsel %vm40, %v169, 0.0
    %v171 = vsel %vm41, %v169, 0.0
    %v172 = vsel %vm59, %v170, 0.0
    %173 = vadd.xlane.f32.xlu0 %v172
    %v174 = vpop.xlane.xlu0 %173
    %v175 = vsel %vm59, %v171, 0.0
    %176 = vadd.xlane.f32.xlu0 %v175
    %v177 = vpop.xlane.xlu0 %176
    %v178 = vmax.f32 %v174, 1e-12
    %v179 = vmax.f32 %v177, 1e-12
    %v180 = vrcp.pop %v178
    %v181 = vrcp.pop %v179
    %v182 = vmul.f32 %v170, %v180
    %v183 = vmul.f32 %v171, %v181
    %v184 = vld [vmem:[%s1 + $0x5] sm:$0x1]
    %vm185 = vcmp.gt.f32.partialorder %v184, 0.0
    %v186 = vmul.f32 %v184, 0.01
    %v187 = vsel %vm185, %v184, %v186
    %v188 = vsel %vm46, %v187, -inf
    %189 = vmax.xlane.f32.xlu0 %v188
    %v190 = vpop.xlane.xlu0 %189
    %v191 = vsub.f32 %v187, %v190
    %v192 = vmul.f32 %v191, 1.442695
    %v193 = vpow.pop %v192
    %v194 = vlaneseq
    %v195 = vshrl.u32 %v194, 7
    %v196 = vsub.s32 0, %v195
    %v197 = vrot.slane %v193, %v196
    %v198 = vsel %vm40, %v197, 0.0
    %v199 = vsel %vm41, %v197, 0.0
    %v200 = vsel %vm59, %v198, 0.0
    %201 = vadd.xlane.f32.xlu0 %v200
    %v202 = vpop.xlane.xlu0 %201
    %v203 = vsel %vm59, %v199, 0.0
    %204 = vadd.xlane.f32.xlu0 %v203
    %v205 = vpop.xlane.xlu0 %204
    %v206 = vmax.f32 %v202, 1e-12
    %v207 = vmax.f32 %v205, 1e-12
    %v208 = vrcp.pop %v206
    %v209 = vrcp.pop %v207
    %v210 = vmul.f32 %v198, %v208
    %v211 = vmul.f32 %v199, %v209
    %v212 = vld [vmem:[%s1 + $0x6] sm:$0x1]
    %vm213 = vcmp.gt.f32.partialorder %v212, 0.0
    %v214 = vmul.f32 %v212, 0.01
    %v215 = vsel %vm213, %v212, %v214
    %v216 = vsel %vm46, %v215, -inf
    %217 = vmax.xlane.f32.xlu0 %v216
    %v218 = vpop.xlane.xlu0 %217
    %v219 = vsub.f32 %v215, %v218
    %v220 = vmul.f32 %v219, 1.442695
    %v221 = vpow.pop %v220
    %v222 = vlaneseq
    %v223 = vshrl.u32 %v222, 7
    %v224 = vsub.s32 0, %v223
    %v225 = vrot.slane %v221, %v224
    %v226 = vsel %vm40, %v225, 0.0
    %v227 = vsel %vm41, %v225, 0.0
    %v228 = vsel %vm59, %v226, 0.0
    %229 = vadd.xlane.f32.xlu0 %v228
    %v230 = vpop.xlane.xlu0 %229
    %v231 = vsel %vm59, %v227, 0.0
    %232 = vadd.xlane.f32.xlu0 %v231
    %v233 = vpop.xlane.xlu0 %232
    %v234 = vmax.f32 %v230, 1e-12
    %v235 = vmax.f32 %v233, 1e-12
    %v236 = vrcp.pop %v234
    %v237 = vrcp.pop %v235
    %v238 = vmul.f32 %v226, %v236
    %v239 = vmul.f32 %v227, %v237
    %v240 = vld [vmem:[%s1 + $0x7] sm:$0x1]
    %vm241 = vcmp.gt.f32.partialorder %v240, 0.0
    %v242 = vmul.f32 %v240, 0.01
    %v243 = vsel %vm241, %v240, %v242
    %v244 = vsel %vm46, %v243, -inf
    %245 = vmax.xlane.f32.xlu0 %v244
    %v246 = vpop.xlane.xlu0 %245
    %v247 = vsub.f32 %v243, %v246
    %v248 = vmul.f32 %v247, 1.442695
    %v249 = vpow.pop %v248
    %v250 = vlaneseq
    %v251 = vshrl.u32 %v250, 7
    %v252 = vsub.s32 0, %v251
    %v253 = vrot.slane %v249, %v252
    %v254 = vsel %vm40, %v253, 0.0
    %v255 = vsel %vm41, %v253, 0.0
    %v256 = vsel %vm59, %v254, 0.0
    %257 = vadd.xlane.f32.xlu0 %v256
    %v258 = vpop.xlane.xlu0 %257
    %v259 = vsel %vm59, %v255, 0.0
    %260 = vadd.xlane.f32.xlu0 %v259
    %v261 = vpop.xlane.xlu0 %260
    %v262 = vmax.f32 %v258, 1e-12
    %v263 = vmax.f32 %v261, 1e-12
    %v264 = vrcp.pop %v262
    %v265 = vrcp.pop %v263
    %v266 = vmul.f32 %v254, %v264
    %v267 = vmul.f32 %v255, %v265
    %270 = vrot.lane.b32.xlu0 %v98, 16
    %v271 = vpop.permute.xlu0 %270
    %272 = vrot.lane.b32.xlu0 %v99, 16
    %v273 = vpop.permute.xlu0 %272
    %278 = vrot.lane.b32.xlu0 %v126, 32
    %v279 = vpop.permute.xlu0 %278
    %280 = vrot.lane.b32.xlu0 %v127, 32
    %v281 = vpop.permute.xlu0 %280
    %286 = vrot.lane.b32.xlu0 %v154, 48
    %v287 = vpop.permute.xlu0 %286
    %288 = vrot.lane.b32.xlu0 %v155, 48
    %v289 = vpop.permute.xlu0 %288
    %294 = vrot.lane.b32.xlu0 %v182, 64
    %v295 = vpop.permute.xlu0 %294
    %296 = vrot.lane.b32.xlu0 %v183, 64
    %v297 = vpop.permute.xlu0 %296
    %302 = vrot.lane.b32.xlu0 %v210, 80
    %v303 = vpop.permute.xlu0 %302
    %304 = vrot.lane.b32.xlu0 %v211, 80
    %v305 = vpop.permute.xlu0 %304
    %310 = vrot.lane.b32.xlu0 %v238, 96
    %v311 = vpop.permute.xlu0 %310
    %312 = vrot.lane.b32.xlu0 %v239, 96
    %v313 = vpop.permute.xlu0 %312
    %318 = vrot.lane.b32.xlu0 %v266, 112
    %v319 = vpop.permute.xlu0 %318
    %320 = vrot.lane.b32.xlu0 %v267, 112
    %v321 = vpop.permute.xlu0 %320
    %v324 = vsel %vm59, %v70, %v271
    %v325 = vsel %vm59, %v71, %v273
    %vm326 = vcmask 261120
    %v327 = vsel %vm326, %v324, %v279
    %v328 = vsel %vm326, %v325, %v281
    %vm329 = vcmask 392192
    %v330 = vsel %vm329, %v327, %v287
    %v331 = vsel %vm329, %v328, %v289
    %vm332 = vcmask 523264
    %v333 = vsel %vm332, %v330, %v295
    %v334 = vsel %vm332, %v331, %v297
    %vm335 = vcmask 654336
    %v336 = vsel %vm335, %v333, %v303
    %v337 = vsel %vm335, %v334, %v305
    %vm338 = vcmask 785408
    %v339 = vsel %vm338, %v336, %v311
    %v340 = vsel %vm338, %v337, %v313
    %vm341 = vcmask 916480
    %v342 = vsel %vm341, %v339, %v319
    %v343 = vsel %vm341, %v340, %v321
    %v344 = vld [vmem:[%s2] sm:$0xff]
    %v345 = vld [vmem:[%s2 + $0x8] sm:$0xff]
    %v346 = vld [vmem:[%s2 + $0x10] sm:$0xff]
    %v347 = vld [vmem:[%s2 + $0x18] sm:$0xff]
    %v348 = vld [vmem:[%s2 + $0x20] sm:$0xff]
    %v349 = vld [vmem:[%s2 + $0x28] sm:$0xff]
    %v350 = vld [vmem:[%s2 + $0x30] sm:$0xff]
    %v351 = vld [vmem:[%s2 + $0x38] sm:$0xff]
    %v352 = vld [vmem:[%s2 + $0x40] sm:$0xff]
    %v353 = vld [vmem:[%s2 + $0x48] sm:$0xff]
    %v354 = vld [vmem:[%s2 + $0x50] sm:$0xff]
    %v355 = vld [vmem:[%s2 + $0x58] sm:$0xff]
    %v356 = vld [vmem:[%s2 + $0x60] sm:$0xff]
    %v357 = vld [vmem:[%s2 + $0x68] sm:$0xff]
    %v358 = vld [vmem:[%s2 + $0x70] sm:$0xff]
    %v359 = vld [vmem:[%s2 + $0x78] sm:$0xff]
    %360 = vmatprep.subr.mxu0 0.0
    %361 = vmatpush1.msra.mxu0 %v359
    %362 = vmatprep.subr.mxu0 0.0
    %363 = vmatpush1.msra.mxu0 %v358
    %364 = vmatprep.subr.mxu0 0.0
    %365 = vmatpush1.msra.mxu0 %v357
    %366 = vmatprep.subr.mxu0 0.0
    %367 = vmatpush1.msra.mxu0 %v356
    %368 = vmatprep.subr.mxu0 0.0
    %369 = vmatpush1.msra.mxu0 %v355
    %370 = vmatprep.subr.mxu0 0.0
    %371 = vmatpush1.msra.mxu0 %v354
    %372 = vmatprep.subr.mxu0 0.0
    %373 = vmatpush1.msra.mxu0 %v353
    %374 = vmatprep.subr.mxu0 0.0
    %375 = vmatpush1.msra.mxu0 %v352
    %376 = vmatprep.subr.mxu0 0.0
    %377 = vmatpush1.msra.mxu0 %v351
    %378 = vmatprep.subr.mxu0 0.0
    %379 = vmatpush1.msra.mxu0 %v350
    %380 = vmatprep.subr.mxu0 0.0
    %381 = vmatpush1.msra.mxu0 %v349
    %382 = vmatprep.subr.mxu0 0.0
    %383 = vmatpush1.msra.mxu0 %v348
    %384 = vmatprep.subr.mxu0 0.0
    %385 = vmatpush1.msra.mxu0 %v347
    %386 = vmatprep.subr.mxu0 0.0
    %387 = vmatpush1.msra.mxu0 %v346
    %388 = vmatprep.subr.mxu0 0.0
    %389 = vmatpush1.msra.mxu0 %v345
    %390 = vmatprep.subr.mxu0 0.0
    %391 = vmatpush1.msra.mxu0 %v344
    %392 = vmatprep.subr.mxu0 0.0
    %393 = vmatpush2.msra.mxu0 0.0
    %394 = vmatprep.subr.mxu0 0.0
    %395 = vmatpush2.msra.mxu0 0.0
    %396 = vmatprep.subr.mxu0 0.0
    %397 = vmatpush2.msra.mxu0 0.0
    %398 = vmatprep.subr.mxu0 0.0
    %399 = vmatpush2.msra.mxu0 0.0
    %400 = vmatprep.subr.mxu0 0.0
    %401 = vmatpush2.msra.mxu0 0.0
    %402 = vmatprep.subr.mxu0 0.0
    %403 = vmatpush2.msra.mxu0 0.0
    %404 = vmatprep.subr.mxu0 0.0
    %405 = vmatpush2.msra.mxu0 0.0
    %406 = vmatprep.subr.mxu0 0.0
    %407 = vmatpush2.msra.mxu0 0.0
    %408 = vmatprep.subr.mxu0 0.0
    %409 = vmatpush2.msra.mxu0 0.0
    %410 = vmatprep.subr.mxu0 0.0
    %411 = vmatpush2.msra.mxu0 0.0
    %412 = vmatprep.subr.mxu0 0.0
    %413 = vmatpush2.msra.mxu0 0.0
    %414 = vmatprep.subr.mxu0 0.0
    %415 = vmatpush2.msra.mxu0 0.0
    %416 = vmatprep.subr.mxu0 0.0
    %417 = vmatpush2.msra.mxu0 0.0
    %418 = vmatprep.subr.mxu0 0.0
    %419 = vmatpush2.msra.mxu0 0.0
    %420 = vmatprep.subr.mxu0 0.0
    %421 = vmatpush2.msra.mxu0 0.0
    %422 = vmatprep.subr.mxu0 0.0
    %423 = vmatpush2.msra.mxu0 0.0
    %424 = vmatprep.mubr.f32.mxu0 0.0
    %425 = vmatmul.mubr.f32.gmra.mxu0 %v342
    %v426 = vpop.f32.mrf.mxu0
    %v427 = vadd.f32 0.0, %v426
    %v428 = vpop.f32.mrf.mxu0
    %429 = vmatprep.mubr.f32.mxu0 0.0
    %430 = vmatmul.mubr.f32.gmra.mxu0 %v343
    %v431 = vpop.f32.mrf.mxu0
    %v432 = vadd.f32 0.0, %v431
    %v433 = vpop.f32.mrf.mxu0
    %434 = vdwg.mxu0
    %vm435 = vcmp.gt.f32.partialorder %v427, 0.0
    %vm436 = vcmp.gt.f32.partialorder %v432, 0.0
    %v437 = vmin.f32 %v427, 0.0
    %v438 = vmin.f32 %v432, 0.0
    %v439 = vmul.f32 %v437, 1.442695
    %v440 = vpow.pop %v439
    %v441 = vmul.f32 %v438, 1.442695
    %v442 = vpow.pop %v441
    %v443 = vsub.f32 %v440, 1.0
    %v444 = vsub.f32 %v442, 1.0
    %v445 = vsel %vm435, %v427, %v443
    %v446 = vsel %vm436, %v432, %v444
    %v447 = vadd.f32 %v445, %v36
    %v448 = vadd.f32 %v446, %v37
    %v449 = vsel %vm332, %v447, 0.0
    %450 = vadd.xlane.f32.xlu0 %v449
    %v451 = vpop.xlane.xlu0 %450
    %v452 = vsel %vm332, %v448, 0.0
    %453 = vadd.xlane.f32.xlu0 %v452
    %v454 = vpop.xlane.xlu0 %453
    %v455 = vrcp.pop 64.0
    %v456 = vmul.f32 %v451, %v455
    %v457 = vmul.f32 %v454, %v455
    %v458 = vsub.f32 %v447, %v456
    %v459 = vsub.f32 %v448, %v457
    %v460 = vmul.f32 %v458, %v458
    %v461 = vmul.f32 %v459, %v459
    %v462 = vsel %vm332, %v460, 0.0
    %463 = vadd.xlane.f32.xlu0 %v462
    %v464 = vpop.xlane.xlu0 %463
    %v465 = vsel %vm332, %v461, 0.0
    %466 = vadd.xlane.f32.xlu0 %v465
    %v467 = vpop.xlane.xlu0 %466
    %v468 = vmul.f32 %v464, %v455
    %v469 = vmul.f32 %v467, %v455
    %v470 = vadd.f32 %v468, 1e-06
    %v471 = vadd.f32 %v469, 1e-06
    %v472 = vrsqrt.pop %v470
    %v473 = vrsqrt.pop %v471
    %v474 = vmul.f32 %v458, %v472
    %v475 = vmul.f32 %v459, %v473
    %v476 = vld [vmem:[%s4] sm:$0x1]
    %v478 = vlaneseq
    %v479 = vshrl.u32 %v478, 7
    %v480 = vsub.s32 0, %v479
    %v481 = vrot.slane %v476, %v480
    %v483 = vmul.f32 %v474, %v481
    %v484 = vmul.f32 %v475, %v481
    %v485 = vld [vmem:[%s5] sm:$0x1]
    %v487 = vlaneseq
    %v488 = vshrl.u32 %v487, 7
    %v489 = vsub.s32 0, %v488
    %v490 = vrot.slane %v485, %v489
    %v492 = vadd.f32 %v483, %v490
    %v493 = vadd.f32 %v484, %v490
    %v494 = vld [vmem:[%s6] sm:$0xff]
    %v495 = vld [vmem:[%s6 + $0x8] sm:$0xff]
    %v496 = vld [vmem:[%s6 + $0x10] sm:$0xff]
    %v497 = vld [vmem:[%s6 + $0x18] sm:$0xff]
    %v498 = vld [vmem:[%s6 + $0x20] sm:$0xff]
    %v499 = vld [vmem:[%s6 + $0x28] sm:$0xff]
    %v500 = vld [vmem:[%s6 + $0x30] sm:$0xff]
    %v501 = vld [vmem:[%s6 + $0x38] sm:$0xff]
    %v502 = vld [vmem:[%s7] sm:$0x1]
    %v504 = vlaneseq
    %v505 = vshrl.u32 %v504, 7
    %v506 = vsub.s32 0, %v505
    %v507 = vrot.slane %v502, %v506
    %v510 = vsel %vm332, %v492, 0
    %v513 = vsel %vm332, %v493, 0
    %515 = vmatprep.subr.mxu0 0.0
    %516 = vmatpush1.msra.mxu0 0.0
    %517 = vmatprep.subr.mxu0 0.0
    %518 = vmatpush1.msra.mxu0 0.0
    %519 = vmatprep.subr.mxu0 0.0
    %520 = vmatpush1.msra.mxu0 0.0
    %521 = vmatprep.subr.mxu0 0.0
    %522 = vmatpush1.msra.mxu0 0.0
    %523 = vmatprep.subr.mxu0 0.0
    %524 = vmatpush1.msra.mxu0 0.0
    %525 = vmatprep.subr.mxu0 0.0
    %526 = vmatpush1.msra.mxu0 0.0
    %527 = vmatprep.subr.mxu0 0.0
    %528 = vmatpush1.msra.mxu0 0.0
    %529 = vmatprep.subr.mxu0 0.0
    %530 = vmatpush1.msra.mxu0 0.0
    %531 = vmatprep.subr.mxu0 0.0
    %532 = vmatpush1.msra.mxu0 %v501
    %533 = vmatprep.subr.mxu0 0.0
    %534 = vmatpush1.msra.mxu0 %v500
    %535 = vmatprep.subr.mxu0 0.0
    %536 = vmatpush1.msra.mxu0 %v499
    %537 = vmatprep.subr.mxu0 0.0
    %538 = vmatpush1.msra.mxu0 %v498
    %539 = vmatprep.subr.mxu0 0.0
    %540 = vmatpush1.msra.mxu0 %v497
    %541 = vmatprep.subr.mxu0 0.0
    %542 = vmatpush1.msra.mxu0 %v496
    %543 = vmatprep.subr.mxu0 0.0
    %544 = vmatpush1.msra.mxu0 %v495
    %545 = vmatprep.subr.mxu0 0.0
    %546 = vmatpush1.msra.mxu0 %v494
    %547 = vmatprep.subr.mxu0 0.0
    %548 = vmatpush2.msra.mxu0 0.0
    %549 = vmatprep.subr.mxu0 0.0
    %550 = vmatpush2.msra.mxu0 0.0
    %551 = vmatprep.subr.mxu0 0.0
    %552 = vmatpush2.msra.mxu0 0.0
    %553 = vmatprep.subr.mxu0 0.0
    %554 = vmatpush2.msra.mxu0 0.0
    %555 = vmatprep.subr.mxu0 0.0
    %556 = vmatpush2.msra.mxu0 0.0
    %557 = vmatprep.subr.mxu0 0.0
    %558 = vmatpush2.msra.mxu0 0.0
    %559 = vmatprep.subr.mxu0 0.0
    %560 = vmatpush2.msra.mxu0 0.0
    %561 = vmatprep.subr.mxu0 0.0
    %562 = vmatpush2.msra.mxu0 0.0
    %563 = vmatprep.subr.mxu0 0.0
    %564 = vmatpush2.msra.mxu0 0.0
    %565 = vmatprep.subr.mxu0 0.0
    %566 = vmatpush2.msra.mxu0 0.0
    %567 = vmatprep.subr.mxu0 0.0
    %568 = vmatpush2.msra.mxu0 0.0
    %569 = vmatprep.subr.mxu0 0.0
    %570 = vmatpush2.msra.mxu0 0.0
    %571 = vmatprep.subr.mxu0 0.0
    %572 = vmatpush2.msra.mxu0 0.0
    %573 = vmatprep.subr.mxu0 0.0
    %574 = vmatpush2.msra.mxu0 0.0
    %575 = vmatprep.subr.mxu0 0.0
    %576 = vmatpush2.msra.mxu0 0.0
    %577 = vmatprep.subr.mxu0 0.0
    %578 = vmatpush2.msra.mxu0 0.0
    %579 = vmatprep.mubr.f32.mxu0 0.0
    %580 = vmatmul.mubr.f32.gmra.mxu0 %v510
    %v581 = vpop.f32.mrf.mxu0
    %v582 = vadd.f32 %v507, %v581
    %v583 = vpop.f32.mrf.mxu0
    %584 = vmatprep.mubr.f32.mxu0 0.0
    %585 = vmatmul.mubr.f32.gmra.mxu0 %v513
    %v586 = vpop.f32.mrf.mxu0
    %v587 = vadd.f32 %v507, %v586
    %v588 = vpop.f32.mrf.mxu0
    %589 = vdwg.mxu0
    %v590 = vmax.f32 %v582, 0.0
    %v591 = vmax.f32 %v587, 0.0
    %v592 = vld [vmem:[%s8] sm:$0xff]
    %v593 = vld [vmem:[%s8 + $0x8] sm:$0xff]
    %v594 = vld [vmem:[%s8 + $0x10] sm:$0xff]
    %v595 = vld [vmem:[%s8 + $0x18] sm:$0xff]
    %v596 = vld [vmem:[%s8 + $0x20] sm:$0xff]
    %v597 = vld [vmem:[%s8 + $0x28] sm:$0xff]
    %v598 = vld [vmem:[%s8 + $0x30] sm:$0xff]
    %v599 = vld [vmem:[%s8 + $0x38] sm:$0xff]
    %v600 = vld [vmem:[%s8 + $0x40] sm:$0xff]
    %v601 = vld [vmem:[%s8 + $0x48] sm:$0xff]
    %v602 = vld [vmem:[%s8 + $0x50] sm:$0xff]
    %v603 = vld [vmem:[%s8 + $0x58] sm:$0xff]
    %v604 = vld [vmem:[%s8 + $0x60] sm:$0xff]
    %v605 = vld [vmem:[%s8 + $0x68] sm:$0xff]
    %v606 = vld [vmem:[%s8 + $0x70] sm:$0xff]
    %v607 = vld [vmem:[%s8 + $0x78] sm:$0xff]
    %v608 = vld [vmem:[%s9] sm:$0x1]
    %v610 = vlaneseq
    %v611 = vshrl.u32 %v610, 7
    %v612 = vsub.s32 0, %v611
    %v613 = vrot.slane %v608, %v612
    %615 = vmatprep.subr.mxu0 0.0
    %616 = vmatpush1.msra.mxu0 %v607
    %617 = vmatprep.subr.mxu0 0.0
    %618 = vmatpush1.msra.mxu0 %v606
    %619 = vmatprep.subr.mxu0 0.0
    %620 = vmatpush1.msra.mxu0 %v605
    %621 = vmatprep.subr.mxu0 0.0
    %622 = vmatpush1.msra.mxu0 %v604
    %623 = vmatprep.subr.mxu0 0.0
    %624 = vmatpush1.msra.mxu0 %v603
    %625 = vmatprep.subr.mxu0 0.0
    %626 = vmatpush1.msra.mxu0 %v602
    %627 = vmatprep.subr.mxu0 0.0
    %628 = vmatpush1.msra.mxu0 %v601
    %629 = vmatprep.subr.mxu0 0.0
    %630 = vmatpush1.msra.mxu0 %v600
    %631 = vmatprep.subr.mxu0 0.0
    %632 = vmatpush1.msra.mxu0 %v599
    %633 = vmatprep.subr.mxu0 0.0
    %634 = vmatpush1.msra.mxu0 %v598
    %635 = vmatprep.subr.mxu0 0.0
    %636 = vmatpush1.msra.mxu0 %v597
    %637 = vmatprep.subr.mxu0 0.0
    %638 = vmatpush1.msra.mxu0 %v596
    %639 = vmatprep.subr.mxu0 0.0
    %640 = vmatpush1.msra.mxu0 %v595
    %641 = vmatprep.subr.mxu0 0.0
    %642 = vmatpush1.msra.mxu0 %v594
    %643 = vmatprep.subr.mxu0 0.0
    %644 = vmatpush1.msra.mxu0 %v593
    %645 = vmatprep.subr.mxu0 0.0
    %646 = vmatpush1.msra.mxu0 %v592
    %647 = vmatprep.subr.mxu0 0.0
    %648 = vmatpush2.msra.mxu0 0.0
    %649 = vmatprep.subr.mxu0 0.0
    %650 = vmatpush2.msra.mxu0 0.0
    %651 = vmatprep.subr.mxu0 0.0
    %652 = vmatpush2.msra.mxu0 0.0
    %653 = vmatprep.subr.mxu0 0.0
    %654 = vmatpush2.msra.mxu0 0.0
    %655 = vmatprep.subr.mxu0 0.0
    %656 = vmatpush2.msra.mxu0 0.0
    %657 = vmatprep.subr.mxu0 0.0
    %658 = vmatpush2.msra.mxu0 0.0
    %659 = vmatprep.subr.mxu0 0.0
    %660 = vmatpush2.msra.mxu0 0.0
    %661 = vmatprep.subr.mxu0 0.0
    %662 = vmatpush2.msra.mxu0 0.0
    %663 = vmatprep.subr.mxu0 0.0
    %664 = vmatpush2.msra.mxu0 0.0
    %665 = vmatprep.subr.mxu0 0.0
    %666 = vmatpush2.msra.mxu0 0.0
    %667 = vmatprep.subr.mxu0 0.0
    %668 = vmatpush2.msra.mxu0 0.0
    %669 = vmatprep.subr.mxu0 0.0
    %670 = vmatpush2.msra.mxu0 0.0
    %671 = vmatprep.subr.mxu0 0.0
    %672 = vmatpush2.msra.mxu0 0.0
    %673 = vmatprep.subr.mxu0 0.0
    %674 = vmatpush2.msra.mxu0 0.0
    %675 = vmatprep.subr.mxu0 0.0
    %676 = vmatpush2.msra.mxu0 0.0
    %677 = vmatprep.subr.mxu0 0.0
    %678 = vmatpush2.msra.mxu0 0.0
    %679 = vmatprep.mubr.f32.mxu0 0.0
    %680 = vmatmul.mubr.f32.gmra.mxu0 %v590
    %v681 = vpop.f32.mrf.mxu0
    %v682 = vadd.f32 %v613, %v681
    %v683 = vpop.f32.mrf.mxu0
    %684 = vmatprep.mubr.f32.mxu0 0.0
    %685 = vmatmul.mubr.f32.gmra.mxu0 %v591
    %v686 = vpop.f32.mrf.mxu0
    %v687 = vadd.f32 %v613, %v686
    %v688 = vpop.f32.mrf.mxu0
    %689 = vdwg.mxu0
    %v690 = vadd.f32 %v447, %v682
    %v691 = vadd.f32 %v448, %v687
    %692 = vst.msk [vmem:[#allocation2] sm:$0xff] %vm332, %v690
    %693 = vst.msk [vmem:[#allocation2 + $0x8] sm:$0xff] %vm332, %v691
    // Predicated region
    $region42: #{tpu_custom_call.1} parent=1 // pred_check
      _
    $region43: #{tpu_custom_call.1} parent=1 // pred_check_branch
      %695 = sbr.rel (0) target = $region45
    $region44: #{tpu_custom_call.1} parent=1 // pred_region
      %s697 = ssub.s32 256, 256
      %698 = vsyncadd [#allocation3], %s697
      %s699 = sshll.u32 [#allocation2], 4
      %s700 = int_to_ptr.vmem [resolvable:$true] %s699
      %705 = dma.vmem_to_hbm [thread:$0]  %s700, 256, %s10, [#allocation3], 128, 128, 8
    $region45: #{tpu_custom_call.1} parent=1 // pred_fallthru
      _
    // Predicated region
    $region46: #{tpu_custom_call.1} parent=1 // pred_check
      _
    $region47: #{tpu_custom_call.1} parent=1 // pred_check_branch
      %707 = sbr.rel (0) target = $region49
    $region48: #{tpu_custom_call.1} parent=1 // pred_region
      %708 = dma.done [#allocation3], 256
    $region49: #{tpu_custom_call.1} parent=1 // pred_fallthru
      _
    %709 = vsyncpa [#allocation3], 1

</llo_original>
